<compile_context>
chip_gen: v6e
topology: v6e:2x2x1
jax: 0.10.0
libtpu: 0.0.40
codegen_flags: <defaults>
</compile_context>

<pallas_src>
import functools

import numpy as np

import jax
import jax.numpy as jnp
from jax.experimental import pallas as pl
from jax.experimental.pallas import tpu as pltpu


def _round_up(v, m):
    return ((v + m - 1) // m) * m


# --------------------------------- kernel --------------------------------------------


def _skip_double_q_kernel(x_ref, w0_ref, b0_ref, wy_ref, wxall_ref, bhall_ref,
                          wn_ref, bn_ref, o_ref, *, num_hidden, h2p):
    """One batch tile of the full network: l0 -> hidden skip layers -> final layer."""
    bf = wy_ref.dtype
    x = x_ref[...]                                                     # (TB, n_in) bf16

    # Loop-invariant skip contribution for ALL hidden layers in one wide MXU pass,
    # with every hidden bias folded in (removes one dependent matmul + add per layer
    # from the serial chain).
    xc = (jnp.dot(x, wxall_ref[...], preferred_element_type=jnp.float32)
          + bhall_ref[...])                                            # (TB, L*H2p) f32

    # l0 + ReLU (bf16 MXU operands, f32 accumulate; bias/ReLU in f32).
    y = jnp.dot(x, w0_ref[...], preferred_element_type=jnp.float32) + b0_ref[...]
    y = jnp.maximum(y, 0.0)                                            # (TB, H2p) f32

    # Hidden GroupedLinear skip layers, concat-free:
    #   concat([y0, x, y1, x]) @ Wh == y @ Wy + x @ Wx, with the x part already in xc.
    for i in range(num_hidden):                                        # static unroll
        y = jnp.dot(y.astype(bf), wy_ref[i], preferred_element_type=jnp.float32)
        y = jnp.maximum(y + xc[:, i * h2p:(i + 1) * h2p], 0.0)

    # Final GroupedLinear (no activation); output kept at its true lane width.
    o_ref[...] = (jnp.dot(y.astype(bf), wn_ref[...], preferred_element_type=jnp.float32)
                  + bn_ref[...])


def _resident_spec(shape, single_buffer=False):
    """Full-array block with a constant index_map -> stays VMEM-resident across steps."""
    nd = len(shape)
    index_map = lambda i, _nd=nd: (0,) * _nd
    if single_buffer:
        # v7x: halve resident-weight VMEM footprint (a constant index_map never needs
        # double-buffering). Off by default; only matters at production widths.
        return pl.BlockSpec(shape, index_map, pipeline_mode=pl.Buffered(1))
    return pl.BlockSpec(shape, index_map)


# ----------------------------- parameter preparation ---------------------------------


def _group_mask(inp, outp, groups=2):
    cin, cout = inp // groups, outp // groups
    m = jnp.zeros((inp, outp), jnp.float32)
    for g in range(groups):
        m = m.at[g * cin:(g + 1) * cin, g * cout:(g + 1) * cout].set(1.0)
    return m


def prepare_params(params, *, n_hid, validate=True):
    """Restructure / pad / cast the module parameters once per parameter update.

    Runs the concat-free Wy/Wx split, folds all hidden biases into one row vector,
    lane-pads the hidden width to a multiple of 128, and casts weights to bf16.
    Call this OUTSIDE the per-step hot path (it can be jitted with validate=False).
    """
    w0, b0, wh, bh, wn, bn = params
    num_hidden = int(wh.shape[0])
    n_in, H2 = int(w0.shape[0]), int(w0.shape[1])
    n_out2 = int(wn.shape[1])
    assert H2 == 2 * n_hid and wh.shape[1] == 2 * (n_hid + n_in)

    if validate:
        # The Wy/Wx restructure is only exact if the groups=2 block-diagonal mask has
        # already been applied to wh (otherwise the x contribution is double-counted).
        try:
            whn = np.asarray(wh)
        except Exception:                       # traced value: skip the eager check
            whn = None
        if whn is not None:
            mask = np.asarray(_group_mask(2 * (n_hid + n_in), H2, 2))
            assert np.all(whn * (1.0 - mask) == 0.0), (
                "hidden weights must have the groups=2 block-diagonal mask pre-applied")

    # inp = [y0, x, y1, x]  =>  inp @ Wh == y @ Wy + x @ Wx
    wy = jnp.concatenate(
        [wh[:, :n_hid, :], wh[:, n_hid + n_in:2 * n_hid + n_in, :]], axis=1)   # (L,H2,H2)
    wx = wh[:, n_hid:n_hid + n_in, :] + wh[:, 2 * n_hid + n_in:, :]            # (L,n_in,H2)

    # Lane-pad hidden width to a multiple of 128; padded lanes are exact zeros all the
    # way through (zero bias, zero wy rows/cols, zero wn rows), so numerics are unchanged.
    h2p = _round_up(H2, 128)
    L = num_hidden

    w0p = jnp.zeros((n_in, h2p), w0.dtype).at[:, :H2].set(w0)
    b0p = jnp.zeros((1, h2p), jnp.float32).at[:, :H2].set(b0.astype(jnp.float32))
    wyp = jnp.zeros((L, h2p, h2p), wy.dtype).at[:, :H2, :H2].set(wy)
    wxp = jnp.zeros((L, n_in, h2p), wx.dtype).at[:, :, :H2].set(wx)
    wxall = jnp.transpose(wxp, (1, 0, 2)).reshape(n_in, L * h2p)
    bhall = (jnp.zeros((L, 1, h2p), jnp.float32)
             .at[:, :, :H2].set(bh.astype(jnp.float32))).reshape(1, L * h2p)
    wnp_ = jnp.zeros((h2p, n_out2), wn.dtype).at[:H2, :].set(wn)
    bnp_ = bn.astype(jnp.float32).reshape(1, n_out2)

    bf16 = jnp.bfloat16
    return dict(
        w0=w0p.astype(bf16), b0=b0p,
        wy=wyp.astype(bf16), wxall=wxall.astype(bf16), bhall=bhall,
        wn=wnp_.astype(bf16), bn=bnp_,
        num_hidden=L, n_in=n_in, h2p=h2p, n_out2=n_out2)


# ----------------------------------- forward ------------------------------------------


def skip_double_q_forward(x, prep, *, block_b=1024, single_buffer_weights=False):
    """Forward pass. `prep` is the output of prepare_params (cached per param update)."""
    B, n_in = x.shape
    assert n_in == prep["n_in"]
    L, h2p, n_out2 = prep["num_hidden"], prep["h2p"], prep["n_out2"]

    # --- Batch tiling: x / out stream per tile, weights stay VMEM-resident. ---
    TB = min(block_b, _round_up(B, 8))
    if B >= 16:
        # Guarantee >= 2 grid steps so the "parallel" batch axis can actually be sharded
        # across both TensorCores on v7x (no-op cost on single-TC v5e/v6e).
        TB = min(TB, _round_up(-(-B // 2), 8))
    TB = max(8, (TB // 8) * 8)
    B_pad = _round_up(B, TB)

    x_b = x.astype(jnp.bfloat16)
    if B_pad != B:
        x_b = jnp.zeros((B_pad, n_in), jnp.bfloat16).at[:B].set(x_b)
    grid = (B_pad // TB,)

    args = (x_b, prep["w0"], prep["b0"], prep["wy"], prep["wxall"],
            prep["bhall"], prep["wn"], prep["bn"])
    in_specs = [pl.BlockSpec((TB, n_in), lambda i: (i, 0))] + \
               [_resident_spec(a.shape, single_buffer_weights) for a in args[1:]]

    flops = 2 * B_pad * (n_in * h2p + n_in * L * h2p + L * h2p * h2p + h2p * n_out2)
    bytes_accessed = int(sum(int(a.size) * a.dtype.itemsize for a in args)
                         + B_pad * n_out2 * 4)

    kernel = functools.partial(_skip_double_q_kernel, num_hidden=L, h2p=h2p)
    out = pl.pallas_call(
        kernel,
        grid=grid,
        in_specs=in_specs,
        out_specs=pl.BlockSpec((TB, n_out2), lambda i: (i, 0)),
        out_shape=jax.ShapeDtypeStruct((B_pad, n_out2), jnp.float32),
        compiler_params=pltpu.CompilerParams(dimension_semantics=("parallel",)),
        cost_estimate=pl.CostEstimate(flops=flops, transcendentals=0,
                                      bytes_accessed=bytes_accessed),
    )(*args)
    return out[:B]


# ----------------------------- references & init --------------------------------------


def ref_forward(x, params, *, n_hid):
    """Pure-JAX f32 reference mirroring the PyTorch forward (concat formulation)."""
    w0, b0, wh, bh, wn, bn = params
    y = jnp.maximum(x @ w0 + b0, 0.0)
    for i in range(wh.shape[0]):
        y0, y1 = y[:, :n_hid], y[:, n_hid:]
        inp = jnp.concatenate([y0, x, y1, x], axis=1)
        y = jnp.maximum(inp @ wh[i] + bh[i], 0.0)
    return y @ wn + bn


def ref_forward_bf16(x, params, *, n_hid):
    """Reference matching the kernel's numerics (bf16 operands, f32 accumulation) but
    using the ORIGINAL concat formulation -- validates the Wy/Wx/xc restructure."""
    w0, b0, wh, bh, wn, bn = params
    bf = jnp.bfloat16

    def dot(a, b):
        return jnp.dot(a.astype(bf), b.astype(bf), preferred_element_type=jnp.float32)

    xb = x.astype(bf).astype(jnp.float32)       # x quantized once, like the wrapper
    y = jnp.maximum(dot(xb, w0) + b0, 0.0)
    for i in range(wh.shape[0]):
        y0, y1 = y[:, :n_hid], y[:, n_hid:]
        inp = jnp.concatenate([y0, xb, y1, xb], axis=1)
        y = jnp.maximum(dot(inp, wh[i]) + bh[i], 0.0)
    return dot(y, wn) + bn


def init_params(key, n_in, n_layers, n_hid, n_out=1, zero_final=True):
    """Deterministic parameter init matching the module's shapes (weights are (in, out))."""
    assert n_layers >= 2
    H2 = 2 * n_hid
    n_hin2 = 2 * (n_in + n_hid)
    keys = jax.random.split(key, 2 * n_layers + 2)

    def unif(k, shape, bound):
        return jax.random.uniform(k, shape, jnp.float32, -bound, bound)

    b_in = float(n_in) ** -0.5
    w0 = unif(keys[0], (n_in, H2), b_in)
    b0 = unif(keys[1], (1, H2), b_in)

    mh = _group_mask(n_hin2, H2, 2)
    whs, bhs = [], []
    b_h = float(n_hin2) ** -0.5
    for i in range(n_layers - 1):
        whs.append(unif(keys[2 + 2 * i], (n_hin2, H2), b_h) * mh)   # mask pre-applied
        bhs.append(unif(keys[3 + 2 * i], (1, H2), b_h))
    wh = jnp.stack(whs)
    bh = jnp.stack(bhs)

    if zero_final:
        wn = jnp.zeros((H2, 2 * n_out), jnp.float32)
        bn = jnp.zeros((1, 2 * n_out), jnp.float32)
    else:
        b_n = float(H2) ** -0.5
        wn = unif(keys[-2], (H2, 2 * n_out), b_n) * _group_mask(H2, 2 * n_out, 2)
        bn = unif(keys[-1], (1, 2 * n_out), b_n)
    return (w0, b0, wh, bh, wn, bn)


if __name__ == "__main__":
    n_in, n_layers, n_hid, n_out = 16, 3, 32, 1
    key = jax.random.PRNGKey(0)
    kx, kx2, kp, kv = jax.random.split(key, 4)

    # Case 1: faithful init (final GroupedLinear zero-filled), B=8, single grid step.
    B = 8
    x = jax.random.normal(kx, (B, n_in), jnp.float32)
    params = init_params(kp, n_in, n_layers, n_hid, n_out, zero_final=True)
    prep = prepare_params(params, n_hid=n_hid)          # runs once per parameter update
    out = skip_double_q_forward(x, prep)
    jax.block_until_ready(out)
    assert out.shape == (B, 2 * n_out)
    assert jnp.allclose(out, ref_forward(x, params, n_hid=n_hid), atol=3e-2, rtol=3e-2)

    # Case 2: nonzero final layer + multi-step batch tiling (grid=3) to exercise the full
    # numeric path, the Wy/Wx/xc restructure, and the streaming batch BlockSpecs.
    B2 = 48
    x2 = jax.random.normal(kx2, (B2, n_in), jnp.float32)
    vparams = init_params(kv, n_in, n_layers, n_hid, n_out, zero_final=False)
    vprep = prepare_params(vparams, n_hid=n_hid)
    vout = skip_double_q_forward(x2, vprep, block_b=16)
    jax.block_until_ready(vout)
    assert vout.shape == (B2, 2 * n_out)
    # Tight check against a reference with identical numerics (bf16 ops, f32 accum):
    assert jnp.allclose(vout, ref_forward_bf16(x2, vparams, n_hid=n_hid),
                        atol=5e-4, rtol=5e-4)
    # Looser check against the pure-f32 PyTorch-equivalent reference:
    assert jnp.allclose(vout, ref_forward(x2, vparams, n_hid=n_hid),
                        atol=3e-2, rtol=3e-2)

    print("KERNEL_OK")
</pallas_src>

<mosaic_0001>
module attributes {stable_mosaic.version = 11 : i64} {
  func.func @_skip_double_q_kernel(%arg0: i32, %arg1: memref<8x16xbf16, #tpu.memory_space<vmem>>, %arg2: memref<16x128xbf16, #tpu.memory_space<vmem>>, %arg3: memref<1x128xf32, #tpu.memory_space<vmem>>, %arg4: memref<2x128x128xbf16, #tpu.memory_space<vmem>>, %arg5: memref<16x256xbf16, #tpu.memory_space<vmem>>, %arg6: memref<1x256xf32, #tpu.memory_space<vmem>>, %arg7: memref<128x2xbf16, #tpu.memory_space<vmem>>, %arg8: memref<1x2xf32, #tpu.memory_space<vmem>>, %arg9: memref<8x2xf32, #tpu.memory_space<vmem>>) attributes {dimension_semantics = [#tpu.dimension_semantics<parallel>], iteration_bounds = array<i64: 1>, scalar_prefetch = 0 : i64, scratch_operands = 0 : i64, tpu.core_type = #tpu.core_type<tc>, window_params = [{transform_indices = @transform_0, window_bounds = array<i64: 8, 16>}, {pipeline_mode = #tpu.pipeline_mode<synchronous>, transform_indices = @transform_1, window_bounds = array<i64: 16, 128>}, {pipeline_mode = #tpu.pipeline_mode<synchronous>, transform_indices = @transform_2, window_bounds = array<i64: 1, 128>}, {pipeline_mode = #tpu.pipeline_mode<synchronous>, transform_indices = @transform_3, window_bounds = array<i64: 2, 128, 128>}, {pipeline_mode = #tpu.pipeline_mode<synchronous>, transform_indices = @transform_4, window_bounds = array<i64: 16, 256>}, {pipeline_mode = #tpu.pipeline_mode<synchronous>, transform_indices = @transform_5, window_bounds = array<i64: 1, 256>}, {pipeline_mode = #tpu.pipeline_mode<synchronous>, transform_indices = @transform_6, window_bounds = array<i64: 128, 2>}, {pipeline_mode = #tpu.pipeline_mode<synchronous>, transform_indices = @transform_7, window_bounds = array<i64: 1, 2>}, {transform_indices = @transform_8, window_bounds = array<i64: 8, 2>}]} {
    %c0 = arith.constant 0 : index
    %c0_0 = arith.constant 0 : index
    %0 = vector.load %arg1[%c0, %c0_0] : memref<8x16xbf16, #tpu.memory_space<vmem>>, vector<8x16xbf16>
    %c0_1 = arith.constant 0 : index
    %c0_2 = arith.constant 0 : index
    %1 = vector.load %arg5[%c0_1, %c0_2] : memref<16x256xbf16, #tpu.memory_space<vmem>>, vector<16x256xbf16>
    %cst = arith.constant dense<0.000000e+00> : vector<8x256xf32>
    %2 = tpu.matmul %0, %1, %cst {dimension_numbers = #tpu.dot_dimension_numbers<[1], [0], [0], [1], [0, 0, 1, 1], [], []>} : vector<8x16xbf16>, vector<16x256xbf16>, vector<8x256xf32> -> vector<8x256xf32>
    %c0_3 = arith.constant 0 : index
    %c0_4 = arith.constant 0 : index
    %3 = vector.load %arg6[%c0_3, %c0_4] : memref<1x256xf32, #tpu.memory_space<vmem>>, vector<1x256xf32>
    %4 = vector.broadcast %3 : vector<1x256xf32> to vector<8x256xf32>
    %5 = arith.addf %2, %4 : vector<8x256xf32>
    %c0_5 = arith.constant 0 : index
    %c0_6 = arith.constant 0 : index
    %6 = vector.load %arg2[%c0_5, %c0_6] : memref<16x128xbf16, #tpu.memory_space<vmem>>, vector<16x128xbf16>
    %cst_7 = arith.constant dense<0.000000e+00> : vector<8x128xf32>
    %7 = tpu.matmul %0, %6, %cst_7 {dimension_numbers = #tpu.dot_dimension_numbers<[1], [0], [0], [1], [0, 0, 1, 1], [], []>} : vector<8x16xbf16>, vector<16x128xbf16>, vector<8x128xf32> -> vector<8x128xf32>
    %c0_8 = arith.constant 0 : index
    %c0_9 = arith.constant 0 : index
    %8 = vector.load %arg3[%c0_8, %c0_9] : memref<1x128xf32, #tpu.memory_space<vmem>>, vector<1x128xf32>
    %9 = vector.broadcast %8 : vector<1x128xf32> to vector<8x128xf32>
    %10 = arith.addf %7, %9 : vector<8x128xf32>
    %cst_10 = arith.constant 0.000000e+00 : f32
    %11 = vector.broadcast %cst_10 : f32 to vector<8x128xf32>
    %12 = arith.maximumf %10, %11 : vector<8x128xf32>
    %13 = arith.truncf %12 : vector<8x128xf32> to vector<8x128xbf16>
    %c0_11 = arith.constant 0 : index
    %c0_12 = arith.constant 0 : index
    %c0_13 = arith.constant 0 : index
    %14 = vector.load %arg4[%c0_11, %c0_12, %c0_13] : memref<2x128x128xbf16, #tpu.memory_space<vmem>>, vector<1x128x128xbf16>
    %15 = vector.shape_cast %14 : vector<1x128x128xbf16> to vector<128x128xbf16>
    %cst_14 = arith.constant dense<0.000000e+00> : vector<8x128xf32>
    %16 = tpu.matmul %13, %15, %cst_14 {dimension_numbers = #tpu.dot_dimension_numbers<[1], [0], [0], [1], [0, 0, 1, 1], [], []>} : vector<8x128xbf16>, vector<128x128xbf16>, vector<8x128xf32> -> vector<8x128xf32>
    %17 = vector.extract_strided_slice %5 {offsets = [0, 0], sizes = [8, 128], strides = [1, 1]} : vector<8x256xf32> to vector<8x128xf32>
    %18 = arith.addf %16, %17 : vector<8x128xf32>
    %cst_15 = arith.constant 0.000000e+00 : f32
    %19 = vector.broadcast %cst_15 : f32 to vector<8x128xf32>
    %20 = arith.maximumf %18, %19 : vector<8x128xf32>
    %21 = arith.truncf %20 : vector<8x128xf32> to vector<8x128xbf16>
    %c1 = arith.constant 1 : index
    %c0_16 = arith.constant 0 : index
    %c0_17 = arith.constant 0 : index
    %22 = vector.load %arg4[%c1, %c0_16, %c0_17] : memref<2x128x128xbf16, #tpu.memory_space<vmem>>, vector<1x128x128xbf16>
    %23 = vector.shape_cast %22 : vector<1x128x128xbf16> to vector<128x128xbf16>
    %cst_18 = arith.constant dense<0.000000e+00> : vector<8x128xf32>
    %24 = tpu.matmul %21, %23, %cst_18 {dimension_numbers = #tpu.dot_dimension_numbers<[1], [0], [0], [1], [0, 0, 1, 1], [], []>} : vector<8x128xbf16>, vector<128x128xbf16>, vector<8x128xf32> -> vector<8x128xf32>
    %25 = vector.extract_strided_slice %5 {offsets = [0, 128], sizes = [8, 128], strides = [1, 1]} : vector<8x256xf32> to vector<8x128xf32>
    %26 = arith.addf %24, %25 : vector<8x128xf32>
    %cst_19 = arith.constant 0.000000e+00 : f32
    %27 = vector.broadcast %cst_19 : f32 to vector<8x128xf32>
    %28 = arith.maximumf %26, %27 : vector<8x128xf32>
    %29 = arith.truncf %28 : vector<8x128xf32> to vector<8x128xbf16>
    %c0_20 = arith.constant 0 : index
    %c0_21 = arith.constant 0 : index
    %30 = vector.load %arg7[%c0_20, %c0_21] : memref<128x2xbf16, #tpu.memory_space<vmem>>, vector<128x2xbf16>
    %cst_22 = arith.constant dense<0.000000e+00> : vector<8x2xf32>
    %31 = tpu.matmul %29, %30, %cst_22 {dimension_numbers = #tpu.dot_dimension_numbers<[1], [0], [0], [1], [0, 0, 1, 1], [], []>} : vector<8x128xbf16>, vector<128x2xbf16>, vector<8x2xf32> -> vector<8x2xf32>
    %c0_23 = arith.constant 0 : index
    %c0_24 = arith.constant 0 : index
    %32 = vector.load %arg8[%c0_23, %c0_24] : memref<1x2xf32, #tpu.memory_space<vmem>>, vector<1x2xf32>
    %33 = vector.broadcast %32 : vector<1x2xf32> to vector<8x2xf32>
    %34 = arith.addf %31, %33 : vector<8x2xf32>
    %c0_25 = arith.constant 0 : index
    %c0_26 = arith.constant 0 : index
    %35 = vector.load %arg9[%c0_25, %c0_26] : memref<8x2xf32, #tpu.memory_space<vmem>>, vector<8x2xf32>
    tpu.vector_store %arg9[%c0_25, %c0_26], %34 {strides = array<i32>} : memref<8x2xf32, #tpu.memory_space<vmem>>, vector<8x2xf32>,
    return
  }
  func.func @transform_0(%arg0: i32) -> (i32, i32) {
    %c0_i32 = arith.constant 0 : i32
    %c0_i32_0 = arith.constant 0 : i32
    return %arg0, %c0_i32 : i32, i32
  }
  func.func @transform_1(%arg0: i32) -> (i32, i32) {
    %c0_i32 = arith.constant 0 : i32
    %c0_i32_0 = arith.constant 0 : i32
    %c0_i32_1 = arith.constant 0 : i32
    return %c0_i32, %c0_i32_0 : i32, i32
  }
  func.func @transform_2(%arg0: i32) -> (i32, i32) {
    %c0_i32 = arith.constant 0 : i32
    %c0_i32_0 = arith.constant 0 : i32
    %c0_i32_1 = arith.constant 0 : i32
    return %c0_i32, %c0_i32_0 : i32, i32
  }
  func.func @transform_3(%arg0: i32) -> (i32, i32, i32) {
    %c0_i32 = arith.constant 0 : i32
    %c0_i32_0 = arith.constant 0 : i32
    %c0_i32_1 = arith.constant 0 : i32
    %c0_i32_2 = arith.constant 0 : i32
    return %c0_i32, %c0_i32_0, %c0_i32_1 : i32, i32, i32
  }
  func.func @transform_4(%arg0: i32) -> (i32, i32) {
    %c0_i32 = arith.constant 0 : i32
    %c0_i32_0 = arith.constant 0 : i32
    %c0_i32_1 = arith.constant 0 : i32
    return %c0_i32, %c0_i32_0 : i32, i32
  }
  func.func @transform_5(%arg0: i32) -> (i32, i32) {
    %c0_i32 = arith.constant 0 : i32
    %c0_i32_0 = arith.constant 0 : i32
    %c0_i32_1 = arith.constant 0 : i32
    return %c0_i32, %c0_i32_0 : i32, i32
  }
  func.func @transform_6(%arg0: i32) -> (i32, i32) {
    %c0_i32 = arith.constant 0 : i32
    %c0_i32_0 = arith.constant 0 : i32
    %c0_i32_1 = arith.constant 0 : i32
    return %c0_i32, %c0_i32_0 : i32, i32
  }
  func.func @transform_7(%arg0: i32) -> (i32, i32) {
    %c0_i32 = arith.constant 0 : i32
    %c0_i32_0 = arith.constant 0 : i32
    %c0_i32_1 = arith.constant 0 : i32
    return %c0_i32, %c0_i32_0 : i32, i32
  }
  func.func @transform_8(%arg0: i32) -> (i32, i32) {
    %c0_i32 = arith.constant 0 : i32
    %c0_i32_0 = arith.constant 0 : i32
    return %arg0, %c0_i32 : i32, i32
  }
}

</mosaic_0001>

<llo_original>
// kernel: tpu_custom_call.1
$region0: #{tpu_custom_call.1}
  #allocation0 [shape = 'u32[]', space=smem, size = 0x4, offset = 0x4, fixed_abs, tag = 'smem constant byte address 0x4 - core index']
  #allocation1 [shape = 'u32[144,128]{1,0:T(1,128)}', space=vmem, size = 0x12000, scoped, tag = 'internal scratch']
  %s0 = inlined_call_operand.vmem [shape: bf16[8,16], index: 0, kind: input, shape index: {}]
  %s1 = inlined_call_operand.vmem [shape: bf16[16,128], index: 1, kind: input, shape index: {}]
  %s2 = inlined_call_operand.vmem [shape: f32[1,128], index: 2, kind: input, shape index: {}]
  %s3 = inlined_call_operand.hbm [shape: bf16[2,128,128], index: 3, kind: input, shape index: {}]
  %s4 = inlined_call_operand.vmem [shape: bf16[16,256], index: 4, kind: input, shape index: {}]
  %s5 = inlined_call_operand.vmem [shape: f32[1,256], index: 5, kind: input, shape index: {}]
  %s6 = inlined_call_operand.vmem [shape: bf16[128,2], index: 6, kind: input, shape index: {}]
  %s7 = inlined_call_operand.vmem [shape: f32[1,2], index: 7, kind: input, shape index: {}]
  %s8 = inlined_call_operand.vmem [shape: f32[8,2], index: 8, kind: output, shape index: {}]
  %s9 = sld [smem:[#allocation0]]
  $region46: #{tpu_custom_call.1} parent=0
    _
  %s11 = ssub.s32 1, %s9
  %s12 = scalar_select 0, %s11, %s9
  $region1: #{tpu_custom_call.1} parent=0
    #allocation2 [shape = 'u8[65536]{0}', space=vmem, size = 0x10000, scoped, tag = 'input window, operand 3, single buffered']
    #allocation3 [shape = 's32[1]{0}', space=sflag, size = 0x4, scoped, tag = 'scoped memory for tpu_custom_call.1']
    %13 = vsyncpa [#allocation3], 0
    // Predicated region
    $region2: #{tpu_custom_call.1} parent=1 // pred_check
      _
    $region3: #{tpu_custom_call.1} parent=1 // pred_check_branch
      %15 = sbr.rel (0) target = $region5
    $region4: #{tpu_custom_call.1} parent=1 // pred_region
      _
    $region5: #{tpu_custom_call.1} parent=1 // pred_fallthru
      _
    // Predicated region
    $region6: #{tpu_custom_call.1} parent=1 // pred_check
      _
    $region7: #{tpu_custom_call.1} parent=1 // pred_check_branch
      %17 = sbr.rel (0) target = $region9
    $region8: #{tpu_custom_call.1} parent=1 // pred_region
      _
    $region9: #{tpu_custom_call.1} parent=1 // pred_fallthru
      _
    // Predicated region
    $region10: #{tpu_custom_call.1} parent=1 // pred_check
      _
    $region11: #{tpu_custom_call.1} parent=1 // pred_check_branch
      %19 = sbr.rel (0) target = $region13
    $region12: #{tpu_custom_call.1} parent=1 // pred_region
      _
    $region13: #{tpu_custom_call.1} parent=1 // pred_fallthru
      _
    // Predicated region
    $region14: #{tpu_custom_call.1} parent=1 // pred_check
      _
    $region15: #{tpu_custom_call.1} parent=1 // pred_check_branch
      %21 = sbr.rel (0) target = $region17
    $region16: #{tpu_custom_call.1} parent=1 // pred_region
      %s23 = ssub.s32 2048, 2048
      %24 = vsyncadd [#allocation3], %s23
      %s25 = sshll.u32 [#allocation2], 4
      %s26 = int_to_ptr.vmem [resolvable:$true] %s25
      %31 = dma.hbm_to_vmem [thread:$0]  %s3, 2048, %s26, [#allocation3], 64, 64, 4
    $region17: #{tpu_custom_call.1} parent=1 // pred_fallthru
      _
    // Predicated region
    $region18: #{tpu_custom_call.1} parent=1 // pred_check
      _
    $region19: #{tpu_custom_call.1} parent=1 // pred_check_branch
      %33 = sbr.rel (0) target = $region21
    $region20: #{tpu_custom_call.1} parent=1 // pred_region
      _
    $region21: #{tpu_custom_call.1} parent=1 // pred_fallthru
      _
    // Predicated region
    $region22: #{tpu_custom_call.1} parent=1 // pred_check
      _
    $region23: #{tpu_custom_call.1} parent=1 // pred_check_branch
      %35 = sbr.rel (0) target = $region25
    $region24: #{tpu_custom_call.1} parent=1 // pred_region
      _
    $region25: #{tpu_custom_call.1} parent=1 // pred_fallthru
      _
    // Predicated region
    $region26: #{tpu_custom_call.1} parent=1 // pred_check
      _
    $region27: #{tpu_custom_call.1} parent=1 // pred_check_branch
      %37 = sbr.rel (0) target = $region29
    $region28: #{tpu_custom_call.1} parent=1 // pred_region
      _
    $region29: #{tpu_custom_call.1} parent=1 // pred_fallthru
      _
    // Predicated region
    $region30: #{tpu_custom_call.1} parent=1 // pred_check
      _
    $region31: #{tpu_custom_call.1} parent=1 // pred_check_branch
      %39 = sbr.rel (0) target = $region33
    $region32: #{tpu_custom_call.1} parent=1 // pred_region
      _
    $region33: #{tpu_custom_call.1} parent=1 // pred_fallthru
      _
    // Predicated region
    $region34: #{tpu_custom_call.1} parent=1 // pred_check
      _
    $region35: #{tpu_custom_call.1} parent=1 // pred_check_branch
      %41 = sbr.rel (0) target = $region37
    $region36: #{tpu_custom_call.1} parent=1 // pred_region
      %42 = dma.done [#allocation3], 2048
    $region37: #{tpu_custom_call.1} parent=1 // pred_fallthru
      _
    %v44 = vld [vmem:[%s0] sm:$0xf]
    %v45 = vld [vmem:[%s4] sm:$0xff]
    %v46 = vld [vmem:[%s4 + $0x8] sm:$0xff]
    %v47 = vld [vmem:[%s5] sm:$0x3]
    %v49 = vlaneseq
    %v50 = vshrl.u32 %v49, 7
    %v51 = vsub.s32 0, %v50
    %v52 = vrot.slane %v47, %v51
    %v53 = vlaneseq
    %v54 = vshrl.u32 %v53, 7
    %v55 = vsub.s32 1, %v54
    %v56 = vrot.slane %v47, %v55
    %v61 = vunpack.c.l.b16 %v45
    %v62 = vunpack.c.h.b16 %v45
    %v63 = vunpack.c.l.b16 %v46
    %v64 = vunpack.c.h.b16 %v46
    %v65 = vpack.c.b16 %v63, %v61
    %v66 = vpack.c.b16 %v64, %v62
    %vm69 = vcmask 130048
    %v71 = vsel %vm69, %v44, 0
    %73 = vmatprep.subr.bf16.mxu0 0
    %74 = vmatpush1.bf16.msra.mxu0 0
    %75 = vmatprep.subr.bf16.mxu0 0
    %76 = vmatpush1.bf16.msra.mxu0 0
    %77 = vmatprep.subr.bf16.mxu0 0
    %78 = vmatpush1.bf16.msra.mxu0 0
    %79 = vmatprep.subr.bf16.mxu0 0
    %80 = vmatpush1.bf16.msra.mxu0 0
    %81 = vmatprep.subr.bf16.mxu0 0
    %82 = vmatpush1.bf16.msra.mxu0 0
    %83 = vmatprep.subr.bf16.mxu0 0
    %84 = vmatpush1.bf16.msra.mxu0 0
    %85 = vmatprep.subr.bf16.mxu0 0
    %86 = vmatpush1.bf16.msra.mxu0 0
    %87 = vmatprep.subr.bf16.mxu0 %v66
    %88 = vmatpush1.bf16.msra.mxu0 %v65
    %89 = vmatprep.subr.bf16.mxu0 0
    %90 = vmatpush2.bf16.msra.mxu0 0
    %91 = vmatprep.subr.bf16.mxu0 0
    %92 = vmatpush2.bf16.msra.mxu0 0
    %93 = vmatprep.subr.bf16.mxu0 0
    %94 = vmatpush2.bf16.msra.mxu0 0
    %95 = vmatprep.subr.bf16.mxu0 0
    %96 = vmatpush2.bf16.msra.mxu0 0
    %97 = vmatprep.subr.bf16.mxu0 0
    %98 = vmatpush2.bf16.msra.mxu0 0
    %99 = vmatprep.subr.bf16.mxu0 0
    %100 = vmatpush2.bf16.msra.mxu0 0
    %101 = vmatprep.subr.bf16.mxu0 0
    %102 = vmatpush2.bf16.msra.mxu0 0
    %103 = vmatprep.subr.bf16.mxu0 0
    %104 = vmatpush2.bf16.msra.mxu0 0
    %105 = vmatprep.mubr.bf16.mxu0 0
    %106 = vmatmul.mubr.bf16.gmra.mxu0 %v71
    %v107 = vpop.f32.mrf.mxu0
    %v108 = vadd.f32 %v52, %v107
    %v109 = vpop.f32.mrf.mxu0
    %v110 = vadd.f32 %v56, %v109
    %v111 = vpop.f32.mrf.mxu0
    %v112 = vpop.f32.mrf.mxu0
    %113 = vdwg.mxu0
    %v114 = vld [vmem:[%s1] sm:$0xf]
    %v115 = vld [vmem:[%s1 + $0x4] sm:$0xf]
    %v116 = vld [vmem:[%s2] sm:$0x1]
    %v118 = vlaneseq
    %v119 = vshrl.u32 %v118, 7
    %v120 = vsub.s32 0, %v119
    %v121 = vrot.slane %v116, %v120
    %v125 = vunpack.c.l.b16 %v114
    %v126 = vunpack.c.l.b16 %v115
    %v127 = vpack.c.b16 %v126, %v125
    %129 = vmatprep.subr.bf16.mxu0 0
    %130 = vmatpush1.bf16.msra.mxu0 0
    %131 = vmatprep.subr.bf16.mxu0 0
    %132 = vmatpush1.bf16.msra.mxu0 0
    %133 = vmatprep.subr.bf16.mxu0 0
    %134 = vmatpush1.bf16.msra.mxu0 0
    %135 = vmatprep.subr.bf16.mxu0 0
    %136 = vmatpush1.bf16.msra.mxu0 0
    %137 = vmatprep.subr.bf16.mxu0 0
    %138 = vmatpush1.bf16.msra.mxu0 0
    %139 = vmatprep.subr.bf16.mxu0 0
    %140 = vmatpush1.bf16.msra.mxu0 0
    %141 = vmatprep.subr.bf16.mxu0 0
    %142 = vmatpush1.bf16.msra.mxu0 0
    %143 = vmatprep.subr.bf16.mxu0 0
    %144 = vmatpush1.bf16.msra.mxu0 %v127
    %145 = vmatprep.subr.bf16.mxu0 0
    %146 = vmatpush2.bf16.msra.mxu0 0
    %147 = vmatprep.subr.bf16.mxu0 0
    %148 = vmatpush2.bf16.msra.mxu0 0
    %149 = vmatprep.subr.bf16.mxu0 0
    %150 = vmatpush2.bf16.msra.mxu0 0
    %151 = vmatprep.subr.bf16.mxu0 0
    %152 = vmatpush2.bf16.msra.mxu0 0
    %153 = vmatprep.subr.bf16.mxu0 0
    %154 = vmatpush2.bf16.msra.mxu0 0
    %155 = vmatprep.subr.bf16.mxu0 0
    %156 = vmatpush2.bf16.msra.mxu0 0
    %157 = vmatprep.subr.bf16.mxu0 0
    %158 = vmatpush2.bf16.msra.mxu0 0
    %159 = vmatprep.subr.bf16.mxu0 0
    %160 = vmatpush2.bf16.msra.mxu0 0
    %161 = vmatprep.mubr.bf16.mxu0 0
    %162 = vmatmul.mubr.bf16.gmra.mxu0 %v71
    %v163 = vpop.f32.mrf.mxu0
    %v164 = vadd.f32 %v121, %v163
    %v165 = vpop.f32.mrf.mxu0
    %v166 = vpop.f32.mrf.mxu0
    %v167 = vpop.f32.mrf.mxu0
    %168 = vdwg.mxu0
    %v169 = vmax.f32 %v164, 0.0
    %v170 = vpack.c.bf16 %v169, %v169
    %v171 = vld [vmem:[#allocation2] sm:$0xf]
    %v172 = vld [vmem:[#allocation2 + $0x4] sm:$0xf]
    %v173 = vld [vmem:[#allocation2 + $0x8] sm:$0xf]
    %v174 = vld [vmem:[#allocation2 + $0xc] sm:$0xf]
    %v175 = vld [vmem:[#allocation2 + $0x10] sm:$0xf]
    %v176 = vld [vmem:[#allocation2 + $0x14] sm:$0xf]
    %v177 = vld [vmem:[#allocation2 + $0x18] sm:$0xf]
    %v178 = vld [vmem:[#allocation2 + $0x1c] sm:$0xf]
    %v179 = vld [vmem:[#allocation2 + $0x20] sm:$0xf]
    %v180 = vld [vmem:[#allocation2 + $0x24] sm:$0xf]
    %v181 = vld [vmem:[#allocation2 + $0x28] sm:$0xf]
    %v182 = vld [vmem:[#allocation2 + $0x2c] sm:$0xf]
    %v183 = vld [vmem:[#allocation2 + $0x30] sm:$0xf]
    %v184 = vld [vmem:[#allocation2 + $0x34] sm:$0xf]
    %v185 = vld [vmem:[#allocation2 + $0x38] sm:$0xf]
    %v186 = vld [vmem:[#allocation2 + $0x3c] sm:$0xf]
    %v203 = vunpack.c.l.b16 %v171
    %v204 = vunpack.c.l.b16 %v172
    %v205 = vunpack.c.l.b16 %v173
    %v206 = vunpack.c.l.b16 %v174
    %v207 = vunpack.c.l.b16 %v175
    %v208 = vunpack.c.l.b16 %v176
    %v209 = vunpack.c.l.b16 %v177
    %v210 = vunpack.c.l.b16 %v178
    %v211 = vunpack.c.l.b16 %v179
    %v212 = vunpack.c.l.b16 %v180
    %v213 = vunpack.c.l.b16 %v181
    %v214 = vunpack.c.l.b16 %v182
    %v215 = vunpack.c.l.b16 %v183
    %v216 = vunpack.c.l.b16 %v184
    %v217 = vunpack.c.l.b16 %v185
    %v218 = vunpack.c.l.b16 %v186
    %v219 = vpack.c.b16 %v204, %v203
    %v220 = vpack.c.b16 %v206, %v205
    %v221 = vpack.c.b16 %v208, %v207
    %v222 = vpack.c.b16 %v210, %v209
    %v223 = vpack.c.b16 %v212, %v211
    %v224 = vpack.c.b16 %v214, %v213
    %v225 = vpack.c.b16 %v216, %v215
    %v226 = vpack.c.b16 %v218, %v217
    %235 = vmatprep.subr.bf16.mxu0 0
    %236 = vmatpush1.bf16.msra.mxu0 %v226
    %237 = vmatprep.subr.bf16.mxu0 0
    %238 = vmatpush1.bf16.msra.mxu0 %v225
    %239 = vmatprep.subr.bf16.mxu0 0
    %240 = vmatpush1.bf16.msra.mxu0 %v224
    %241 = vmatprep.subr.bf16.mxu0 0
    %242 = vmatpush1.bf16.msra.mxu0 %v223
    %243 = vmatprep.subr.bf16.mxu0 0
    %244 = vmatpush1.bf16.msra.mxu0 %v222
    %245 = vmatprep.subr.bf16.mxu0 0
    %246 = vmatpush1.bf16.msra.mxu0 %v221
    %247 = vmatprep.subr.bf16.mxu0 0
    %248 = vmatpush1.bf16.msra.mxu0 %v220
    %249 = vmatprep.subr.bf16.mxu0 0
    %250 = vmatpush1.bf16.msra.mxu0 %v219
    %251 = vmatprep.subr.bf16.mxu0 0
    %252 = vmatpush2.bf16.msra.mxu0 0
    %253 = vmatprep.subr.bf16.mxu0 0
    %254 = vmatpush2.bf16.msra.mxu0 0
    %255 = vmatprep.subr.bf16.mxu0 0
    %256 = vmatpush2.bf16.msra.mxu0 0
    %257 = vmatprep.subr.bf16.mxu0 0
    %258 = vmatpush2.bf16.msra.mxu0 0
    %259 = vmatprep.subr.bf16.mxu0 0
    %260 = vmatpush2.bf16.msra.mxu0 0
    %261 = vmatprep.subr.bf16.mxu0 0
    %262 = vmatpush2.bf16.msra.mxu0 0
    %263 = vmatprep.subr.bf16.mxu0 0
    %264 = vmatpush2.bf16.msra.mxu0 0
    %265 = vmatprep.subr.bf16.mxu0 0
    %266 = vmatpush2.bf16.msra.mxu0 0
    %267 = vmatprep.mubr.bf16.mxu0 0
    %268 = vmatmul.mubr.bf16.gmra.mxu0 %v170
    %v269 = vpop.f32.mrf.mxu0
    %v270 = vadd.f32 %v108, %v269
    %v271 = vpop.f32.mrf.mxu0
    %v272 = vpop.f32.mrf.mxu0
    %v273 = vpop.f32.mrf.mxu0
    %274 = vdwg.mxu0
    %v275 = vmax.f32 %v270, 0.0
    %v276 = vpack.c.bf16 %v275, %v275
    %s277 = scalar_lea.vmem [#allocation2], 64
    %v278 = vld [vmem:[%s277] sm:$0xf]
    %v279 = vld [vmem:[%s277 + $0x4] sm:$0xf]
    %v280 = vld [vmem:[%s277 + $0x8] sm:$0xf]
    %v281 = vld [vmem:[%s277 + $0xc] sm:$0xf]
    %v282 = vld [vmem:[%s277 + $0x10] sm:$0xf]
    %v283 = vld [vmem:[%s277 + $0x14] sm:$0xf]
    %v284 = vld [vmem:[%s277 + $0x18] sm:$0xf]
    %v285 = vld [vmem:[%s277 + $0x1c] sm:$0xf]
    %v286 = vld [vmem:[%s277 + $0x20] sm:$0xf]
    %v287 = vld [vmem:[%s277 + $0x24] sm:$0xf]
    %v288 = vld [vmem:[%s277 + $0x28] sm:$0xf]
    %v289 = vld [vmem:[%s277 + $0x2c] sm:$0xf]
    %v290 = vld [vmem:[%s277 + $0x30] sm:$0xf]
    %v291 = vld [vmem:[%s277 + $0x34] sm:$0xf]
    %v292 = vld [vmem:[%s277 + $0x38] sm:$0xf]
    %v293 = vld [vmem:[%s277 + $0x3c] sm:$0xf]
    %v310 = vunpack.c.l.b16 %v278
    %v311 = vunpack.c.l.b16 %v279
    %v312 = vunpack.c.l.b16 %v280
    %v313 = vunpack.c.l.b16 %v281
    %v314 = vunpack.c.l.b16 %v282
    %v315 = vunpack.c.l.b16 %v283
    %v316 = vunpack.c.l.b16 %v284
    %v317 = vunpack.c.l.b16 %v285
    %v318 = vunpack.c.l.b16 %v286
    %v319 = vunpack.c.l.b16 %v287
    %v320 = vunpack.c.l.b16 %v288
    %v321 = vunpack.c.l.b16 %v289
    %v322 = vunpack.c.l.b16 %v290
    %v323 = vunpack.c.l.b16 %v291
    %v324 = vunpack.c.l.b16 %v292
    %v325 = vunpack.c.l.b16 %v293
    %v326 = vpack.c.b16 %v311, %v310
    %v327 = vpack.c.b16 %v313, %v312
    %v328 = vpack.c.b16 %v315, %v314
    %v329 = vpack.c.b16 %v317, %v316
    %v330 = vpack.c.b16 %v319, %v318
    %v331 = vpack.c.b16 %v321, %v320
    %v332 = vpack.c.b16 %v323, %v322
    %v333 = vpack.c.b16 %v325, %v324
    %342 = vmatprep.subr.bf16.mxu0 0
    %343 = vmatpush1.bf16.msra.mxu0 %v333
    %344 = vmatprep.subr.bf16.mxu0 0
    %345 = vmatpush1.bf16.msra.mxu0 %v332
    %346 = vmatprep.subr.bf16.mxu0 0
    %347 = vmatpush1.bf16.msra.mxu0 %v331
    %348 = vmatprep.subr.bf16.mxu0 0
    %349 = vmatpush1.bf16.msra.mxu0 %v330
    %350 = vmatprep.subr.bf16.mxu0 0
    %351 = vmatpush1.bf16.msra.mxu0 %v329
    %352 = vmatprep.subr.bf16.mxu0 0
    %353 = vmatpush1.bf16.msra.mxu0 %v328
    %354 = vmatprep.subr.bf16.mxu0 0
    %355 = vmatpush1.bf16.msra.mxu0 %v327
    %356 = vmatprep.subr.bf16.mxu0 0
    %357 = vmatpush1.bf16.msra.mxu0 %v326
    %358 = vmatprep.subr.bf16.mxu0 0
    %359 = vmatpush2.bf16.msra.mxu0 0
    %360 = vmatprep.subr.bf16.mxu0 0
    %361 = vmatpush2.bf16.msra.mxu0 0
    %362 = vmatprep.subr.bf16.mxu0 0
    %363 = vmatpush2.bf16.msra.mxu0 0
    %364 = vmatprep.subr.bf16.mxu0 0
    %365 = vmatpush2.bf16.msra.mxu0 0
    %366 = vmatprep.subr.bf16.mxu0 0
    %367 = vmatpush2.bf16.msra.mxu0 0
    %368 = vmatprep.subr.bf16.mxu0 0
    %369 = vmatpush2.bf16.msra.mxu0 0
    %370 = vmatprep.subr.bf16.mxu0 0
    %371 = vmatpush2.bf16.msra.mxu0 0
    %372 = vmatprep.subr.bf16.mxu0 0
    %373 = vmatpush2.bf16.msra.mxu0 0
    %374 = vmatprep.mubr.bf16.mxu0 0
    %375 = vmatmul.mubr.bf16.gmra.mxu0 %v276
    %v376 = vpop.f32.mrf.mxu0
    %v377 = vadd.f32 %v110, %v376
    %v378 = vpop.f32.mrf.mxu0
    %v379 = vpop.f32.mrf.mxu0
    %v380 = vpop.f32.mrf.mxu0
    %381 = vdwg.mxu0
    %v382 = vmax.f32 %v377, 0.0
    %v383 = vpack.c.bf16 %v382, %v382
    %v384 = vld [vmem:[%s6] sm:$0xf]
    %v385 = vld [vmem:[%s6 + $0x4] sm:$0xf]
    %v386 = vld [vmem:[%s6 + $0x8] sm:$0xf]
    %v387 = vld [vmem:[%s6 + $0xc] sm:$0xf]
    %v388 = vld [vmem:[%s6 + $0x10] sm:$0xf]
    %v389 = vld [vmem:[%s6 + $0x14] sm:$0xf]
    %v390 = vld [vmem:[%s6 + $0x18] sm:$0xf]
    %v391 = vld [vmem:[%s6 + $0x1c] sm:$0xf]
    %v392 = vld [vmem:[%s6 + $0x20] sm:$0xf]
    %v393 = vld [vmem:[%s6 + $0x24] sm:$0xf]
    %v394 = vld [vmem:[%s6 + $0x28] sm:$0xf]
    %v395 = vld [vmem:[%s6 + $0x2c] sm:$0xf]
    %v396 = vld [vmem:[%s6 + $0x30] sm:$0xf]
    %v397 = vld [vmem:[%s6 + $0x34] sm:$0xf]
    %v398 = vld [vmem:[%s6 + $0x38] sm:$0xf]
    %v399 = vld [vmem:[%s6 + $0x3c] sm:$0xf]
    %v400 = vld [vmem:[%s7] sm:$0x1]
    %v402 = vlaneseq
    %v403 = vshrl.u32 %v402, 7
    %v404 = vsub.s32 0, %v403
    %v405 = vrot.slane %v400, %v404
    %v423 = vunpack.c.l.b16 %v384
    %v424 = vunpack.c.l.b16 %v385
    %v425 = vunpack.c.l.b16 %v386
    %v426 = vunpack.c.l.b16 %v387
    %v427 = vunpack.c.l.b16 %v388
    %v428 = vunpack.c.l.b16 %v389
    %v429 = vunpack.c.l.b16 %v390
    %v430 = vunpack.c.l.b16 %v391
    %v431 = vunpack.c.l.b16 %v392
    %v432 = vunpack.c.l.b16 %v393
    %v433 = vunpack.c.l.b16 %v394
    %v434 = vunpack.c.l.b16 %v395
    %v435 = vunpack.c.l.b16 %v396
    %v436 = vunpack.c.l.b16 %v397
    %v437 = vunpack.c.l.b16 %v398
    %v438 = vunpack.c.l.b16 %v399
    %v439 = vpack.c.b16 %v424, %v423
    %v440 = vpack.c.b16 %v426, %v425
    %v441 = vpack.c.b16 %v428, %v427
    %v442 = vpack.c.b16 %v430, %v429
    %v443 = vpack.c.b16 %v432, %v431
    %v444 = vpack.c.b16 %v434, %v433
    %v445 = vpack.c.b16 %v436, %v435
    %v446 = vpack.c.b16 %v438, %v437
    %455 = vmatprep.subr.bf16.mxu0 0
    %456 = vmatpush1.bf16.msra.mxu0 %v446
    %457 = vmatprep.subr.bf16.mxu0 0
    %458 = vmatpush1.bf16.msra.mxu0 %v445
    %459 = vmatprep.subr.bf16.mxu0 0
    %460 = vmatpush1.bf16.msra.mxu0 %v444
    %461 = vmatprep.subr.bf16.mxu0 0
    %462 = vmatpush1.bf16.msra.mxu0 %v443
    %463 = vmatprep.subr.bf16.mxu0 0
    %464 = vmatpush1.bf16.msra.mxu0 %v442
    %465 = vmatprep.subr.bf16.mxu0 0
    %466 = vmatpush1.bf16.msra.mxu0 %v441
    %467 = vmatprep.subr.bf16.mxu0 0
    %468 = vmatpush1.bf16.msra.mxu0 %v440
    %469 = vmatprep.subr.bf16.mxu0 0
    %470 = vmatpush1.bf16.msra.mxu0 %v439
    %471 = vmatprep.subr.bf16.mxu0 0
    %472 = vmatpush2.bf16.msra.mxu0 0
    %473 = vmatprep.subr.bf16.mxu0 0
    %474 = vmatpush2.bf16.msra.mxu0 0
    %475 = vmatprep.subr.bf16.mxu0 0
    %476 = vmatpush2.bf16.msra.mxu0 0
    %477 = vmatprep.subr.bf16.mxu0 0
    %478 = vmatpush2.bf16.msra.mxu0 0
    %479 = vmatprep.subr.bf16.mxu0 0
    %480 = vmatpush2.bf16.msra.mxu0 0
    %481 = vmatprep.subr.bf16.mxu0 0
    %482 = vmatpush2.bf16.msra.mxu0 0
    %483 = vmatprep.subr.bf16.mxu0 0
    %484 = vmatpush2.bf16.msra.mxu0 0
    %485 = vmatprep.subr.bf16.mxu0 0
    %486 = vmatpush2.bf16.msra.mxu0 0
    %487 = vmatprep.mubr.bf16.mxu0 0
    %488 = vmatmul.mubr.bf16.gmra.mxu0 %v383
    %v489 = vpop.f32.mrf.mxu0
    %v490 = vadd.f32 %v405, %v489
    %v491 = vpop.f32.mrf.mxu0
    %v492 = vpop.f32.mrf.mxu0
    %v493 = vpop.f32.mrf.mxu0
    %494 = vdwg.mxu0
    %vm495 = vcmask 15360
    %496 = vst.msk [vmem:[%s8] sm:$0xff] %vm495, %v490
    // Predicated region
    $region38: #{tpu_custom_call.1} parent=1 // pred_check
      _
    $region39: #{tpu_custom_call.1} parent=1 // pred_check_branch
      %498 = sbr.rel (0) target = $region41
    $region40: #{tpu_custom_call.1} parent=1 // pred_region
      _
    $region41: #{tpu_custom_call.1} parent=1 // pred_fallthru
      _
    // Predicated region
    $region42: #{tpu_custom_call.1} parent=1 // pred_check
      _
    $region43: #{tpu_custom_call.1} parent=1 // pred_check_branch
      %500 = sbr.rel (0) target = $region45
    $region44: #{tpu_custom_call.1} parent=1 // pred_region
      _
    $region45: #{tpu_custom_call.1} parent=1 // pred_fallthru
      _
    %501 = vsyncpa [#allocation3], 1

</llo_original>
